<compile_context>
chip_gen: v7x
topology: tpu7x:2x2x1
jax: 0.10.0
libtpu: 0.0.40
codegen_flags: <defaults>
</compile_context>

<pallas_src>
import jax
import jax.numpy as jnp
from jax.experimental import pallas as pl
from jax.experimental.pallas import tpu as pltpu


def _round_up(x, m):
    return ((x + m - 1) // m) * m


def actor_critic_kernel(state_ref, w1_ref, b1_ref, w2_ref, b2_ref, mean_ref, value_ref):
    a = mean_ref.shape[-1]                       # number of actions (static)

    x = state_ref[...]                           # (TB, S)

    # Fused first layer (actor | critic): one matmul, one ReLU.     h: (TB, 2H)
    h = jnp.dot(x, w1_ref[...], preferred_element_type=jnp.float32) + b1_ref[...]
    h = jnp.maximum(h, 0.0)

    # Fused second layer via block-diagonal weight (2H, A+1):
    #   y[:, :A] = h_a @ w2a + b2a   (actor logits)
    #   y[:, A]  = h_c @ w2c + b2c   (critic value)
    y = jnp.dot(h, w2_ref[...], preferred_element_type=jnp.float32) + b2_ref[...]

    mean_ref[...] = jnp.tanh(y[:, :a])           # tanh only on actor lanes
    value_ref[...] = y[:, a:a + 1]               # critic value passes through


def fuse_params(params):
    """Build the fused/block-diagonal weights.  Call ONCE per parameter update
    (hoisted out of the per-step forward so it is not a per-call HBM pass)."""
    S, H = params["w1a"].shape
    A = params["w2a"].shape[1]
    out = A + 1

    w1_cat = jnp.concatenate([params["w1a"], params["w1c"]], axis=1)          # (S, 2H)
    b1_cat = jnp.concatenate([params["b1a"], params["b1c"]], axis=1)          # (1, 2H)

    w2_pad = jnp.zeros((2 * H, out), jnp.float32)
    w2_pad = w2_pad.at[:H, :A].set(params["w2a"])                             # actor block
    w2_pad = w2_pad.at[H:, A:].set(params["w2c"])                             # critic block
    b2_pad = jnp.zeros((1, out), jnp.float32)
    b2_pad = b2_pad.at[:, :A].set(params["b2a"])
    b2_pad = b2_pad.at[:, A:].set(params["b2c"])

    # TODO(synk): in production, cast w1_cat / w2_pad (resident, fetched once) to bf16 here
    # (keep preferred_element_type=f32 in the kernel); do NOT cast `state` in the wrapper —
    # only feed bf16 state if the producer already emits bf16.  Left in f32 here to keep the
    # 1e-5 allclose against the f32 reference.
    return dict(w1=w1_cat, b1=b1_cat, w2=w2_pad, b2=b2_pad)


def _choose_batch_tile(B, tb):
    """Batch tile: multiple of 8, <= B (trailing partial tile handled by Pallas),
    and small enough that the grid has >= 2 tiles when B >= 16 (v7x dual-TC sharding)."""
    if B < 8:
        return B                                  # block dim == full array dim (legal)
    tb_eff = min(_round_up(tb, 8), (B // 8) * 8)
    if B >= 16:
        tb_eff = min(tb_eff, _round_up(pl.cdiv(B, 2), 8))
    return max(tb_eff, 8)


def actor_critic_forward(state, fused, *, tb=1024):
    """state: (B, S) f32; fused: output of fuse_params().

    Returns (action_mean (B, A), state_value (B, 1))."""
    B, S = state.shape
    H2 = fused["w1"].shape[1]                     # 2 * hidden
    OUT = fused["w2"].shape[1]                    # A + 1
    A = OUT - 1

    tb_eff = _choose_batch_tile(B, tb)
    grid = (pl.cdiv(B, tb_eff),)                  # no wrapper-side padding of `state`

    in_specs = [
        pl.BlockSpec((tb_eff, S), lambda i: (i, 0)),     # state: tiled over batch
        pl.BlockSpec((S, H2), lambda i: (0, 0)),         # fused W1: VMEM-resident
        pl.BlockSpec((1, H2), lambda i: (0, 0)),         # fused b1: resident
        pl.BlockSpec((H2, OUT), lambda i: (0, 0)),       # block-diag W2: resident
        pl.BlockSpec((1, OUT), lambda i: (0, 0)),        # padded b2: resident
    ]
    out_specs = [
        pl.BlockSpec((tb_eff, A), lambda i: (i, 0)),     # action_mean: narrow, no slab
        pl.BlockSpec((tb_eff, 1), lambda i: (i, 0)),     # state_value
    ]
    out_shape = [
        jax.ShapeDtypeStruct((B, A), jnp.float32),
        jax.ShapeDtypeStruct((B, 1), jnp.float32),
    ]

    action_mean, state_value = pl.pallas_call(
        actor_critic_kernel,
        out_shape=out_shape,
        grid=grid,
        in_specs=in_specs,
        out_specs=out_specs,
        compiler_params=pltpu.CompilerParams(
            dimension_semantics=("parallel",),    # v7x: shard batch tiles across both TCs
            vmem_limit_bytes=32 * 1024 * 1024,    # guardrail; tiles are far below this
        ),
    )(state, fused["w1"], fused["b1"], fused["w2"], fused["b2"])

    return action_mean, state_value


def init_params(key, state_size, action_size, hidden_size=64):
    """Deterministic init mimicking nn.Linear defaults (uniform +/- 1/sqrt(fan_in)).
    Weights are stored transposed relative to PyTorch: (in_dim, out_dim)."""
    ks = jax.random.split(key, 8)

    def linear(kw, kb, fan_in, fan_out):
        bound = 1.0 / jnp.sqrt(fan_in)
        w = jax.random.uniform(kw, (fan_in, fan_out), jnp.float32, -bound, bound)
        b = jax.random.uniform(kb, (1, fan_out), jnp.float32, -bound, bound)
        return w, b

    w1a, b1a = linear(ks[0], ks[1], state_size, hidden_size)
    w2a, b2a = linear(ks[2], ks[3], hidden_size, action_size)
    w1c, b1c = linear(ks[4], ks[5], state_size, hidden_size)
    w2c, b2c = linear(ks[6], ks[7], hidden_size, 1)
    return dict(w1a=w1a, b1a=b1a, w2a=w2a, b2a=b2a,
                w1c=w1c, b1c=b1c, w2c=w2c, b2c=b2c)


def reference_forward(state, p):
    """Plain-JAX reference (mirrors the PyTorch module exactly)."""
    h_a = jnp.maximum(state @ p["w1a"] + p["b1a"], 0.0)
    action_mean = jnp.tanh(h_a @ p["w2a"] + p["b2a"])
    h_c = jnp.maximum(state @ p["w1c"] + p["b1c"], 0.0)
    state_value = h_c @ p["w2c"] + p["b2c"]
    return action_mean, state_value


if __name__ == "__main__":
    key = jax.random.PRNGKey(0)
    k_param, k_state = jax.random.split(key)

    batch = 8
    state_size = 16
    action_size = 4
    hidden_size = 32

    params = init_params(k_param, state_size, action_size, hidden_size)
    fused = fuse_params(params)                   # hoisted: once per parameter update
    state = jax.random.normal(k_state, (batch, state_size), dtype=jnp.float32)

    action_mean, state_value = actor_critic_forward(state, fused)
    jax.block_until_ready((action_mean, state_value))

    ref_mean, ref_value = reference_forward(state, params)
    assert action_mean.shape == (batch, action_size)
    assert state_value.shape == (batch, 1)
    assert jnp.allclose(action_mean, ref_mean, atol=1e-5, rtol=1e-5)
    assert jnp.allclose(state_value, ref_value, atol=1e-5, rtol=1e-5)

    # Exercise the multi-tile + trailing-partial-tile (no wrapper pad) path.
    big_state = jax.random.normal(k_state, (1037, state_size), dtype=jnp.float32)
    bm, bv = actor_critic_forward(big_state, fused, tb=1024)
    jax.block_until_ready((bm, bv))
    rbm, rbv = reference_forward(big_state, params)
    assert bm.shape == (1037, action_size) and bv.shape == (1037, 1)
    assert jnp.allclose(bm, rbm, atol=1e-5, rtol=1e-5)
    assert jnp.allclose(bv, rbv, atol=1e-5, rtol=1e-5)

    print("KERNEL_OK")
</pallas_src>

<mosaic_0001>
module attributes {stable_mosaic.version = 11 : i64} {
  func.func @actor_critic_kernel(%arg0: i32, %arg1: memref<8x16xf32, #tpu.memory_space<vmem>>, %arg2: memref<16x64xf32, #tpu.memory_space<vmem>>, %arg3: memref<1x64xf32, #tpu.memory_space<vmem>>, %arg4: memref<64x5xf32, #tpu.memory_space<vmem>>, %arg5: memref<1x5xf32, #tpu.memory_space<vmem>>, %arg6: memref<8x4xf32, #tpu.memory_space<vmem>>, %arg7: memref<8x1xf32, #tpu.memory_space<vmem>>) attributes {dimension_semantics = [#tpu.dimension_semantics<parallel>], iteration_bounds = array<i64: 1>, scalar_prefetch = 0 : i64, scratch_operands = 0 : i64, tpu.core_type = #tpu.core_type<tc>, window_params = [{transform_indices = @transform_0, window_bounds = array<i64: 8, 16>}, {pipeline_mode = #tpu.pipeline_mode<synchronous>, transform_indices = @transform_1, window_bounds = array<i64: 16, 64>}, {pipeline_mode = #tpu.pipeline_mode<synchronous>, transform_indices = @transform_2, window_bounds = array<i64: 1, 64>}, {pipeline_mode = #tpu.pipeline_mode<synchronous>, transform_indices = @transform_3, window_bounds = array<i64: 64, 5>}, {pipeline_mode = #tpu.pipeline_mode<synchronous>, transform_indices = @transform_4, window_bounds = array<i64: 1, 5>}, {transform_indices = @transform_5, window_bounds = array<i64: 8, 4>}, {transform_indices = @transform_6, window_bounds = array<i64: 8, 1>}]} {
    %c0 = arith.constant 0 : index
    %c0_0 = arith.constant 0 : index
    %0 = vector.load %arg1[%c0, %c0_0] : memref<8x16xf32, #tpu.memory_space<vmem>>, vector<8x16xf32>
    %c0_1 = arith.constant 0 : index
    %c0_2 = arith.constant 0 : index
    %1 = vector.load %arg2[%c0_1, %c0_2] : memref<16x64xf32, #tpu.memory_space<vmem>>, vector<16x64xf32>
    %cst = arith.constant dense<0.000000e+00> : vector<8x64xf32>
    %2 = tpu.matmul %0, %1, %cst {dimension_numbers = #tpu.dot_dimension_numbers<[1], [0], [0], [1], [0, 0, 1, 1], [], []>} : vector<8x16xf32>, vector<16x64xf32>, vector<8x64xf32> -> vector<8x64xf32>
    %c0_3 = arith.constant 0 : index
    %c0_4 = arith.constant 0 : index
    %3 = vector.load %arg3[%c0_3, %c0_4] : memref<1x64xf32, #tpu.memory_space<vmem>>, vector<1x64xf32>
    %4 = vector.broadcast %3 : vector<1x64xf32> to vector<8x64xf32>
    %5 = arith.addf %2, %4 : vector<8x64xf32>
    %cst_5 = arith.constant 0.000000e+00 : f32
    %6 = vector.broadcast %cst_5 : f32 to vector<8x64xf32>
    %7 = arith.maximumf %5, %6 : vector<8x64xf32>
    %c0_6 = arith.constant 0 : index
    %c0_7 = arith.constant 0 : index
    %8 = vector.load %arg4[%c0_6, %c0_7] : memref<64x5xf32, #tpu.memory_space<vmem>>, vector<64x5xf32>
    %cst_8 = arith.constant dense<0.000000e+00> : vector<8x5xf32>
    %9 = tpu.matmul %7, %8, %cst_8 {dimension_numbers = #tpu.dot_dimension_numbers<[1], [0], [0], [1], [0, 0, 1, 1], [], []>} : vector<8x64xf32>, vector<64x5xf32>, vector<8x5xf32> -> vector<8x5xf32>
    %c0_9 = arith.constant 0 : index
    %c0_10 = arith.constant 0 : index
    %10 = vector.load %arg5[%c0_9, %c0_10] : memref<1x5xf32, #tpu.memory_space<vmem>>, vector<1x5xf32>
    %11 = vector.broadcast %10 : vector<1x5xf32> to vector<8x5xf32>
    %12 = arith.addf %9, %11 : vector<8x5xf32>
    %13 = vector.extract_strided_slice %12 {offsets = [0, 0], sizes = [8, 4], strides = [1, 1]} : vector<8x5xf32> to vector<8x4xf32>
    %14 = math.tanh %13 : vector<8x4xf32>
    %c0_11 = arith.constant 0 : index
    %c0_12 = arith.constant 0 : index
    %15 = vector.load %arg6[%c0_11, %c0_12] : memref<8x4xf32, #tpu.memory_space<vmem>>, vector<8x4xf32>
    tpu.vector_store %arg6[%c0_11, %c0_12], %14 {strides = array<i32>} : memref<8x4xf32, #tpu.memory_space<vmem>>, vector<8x4xf32>,
    %16 = vector.extract_strided_slice %12 {offsets = [0, 4], sizes = [8, 1], strides = [1, 1]} : vector<8x5xf32> to vector<8x1xf32>
    %c0_13 = arith.constant 0 : index
    %c0_14 = arith.constant 0 : index
    %17 = vector.load %arg7[%c0_13, %c0_14] : memref<8x1xf32, #tpu.memory_space<vmem>>, vector<8x1xf32>
    tpu.vector_store %arg7[%c0_13, %c0_14], %16 {strides = array<i32>} : memref<8x1xf32, #tpu.memory_space<vmem>>, vector<8x1xf32>,
    return
  }
  func.func @transform_0(%arg0: i32) -> (i32, i32) {
    %c0_i32 = arith.constant 0 : i32
    %c0_i32_0 = arith.constant 0 : i32
    return %arg0, %c0_i32 : i32, i32
  }
  func.func @transform_1(%arg0: i32) -> (i32, i32) {
    %c0_i32 = arith.constant 0 : i32
    %c0_i32_0 = arith.constant 0 : i32
    %c0_i32_1 = arith.constant 0 : i32
    return %c0_i32, %c0_i32_0 : i32, i32
  }
  func.func @transform_2(%arg0: i32) -> (i32, i32) {
    %c0_i32 = arith.constant 0 : i32
    %c0_i32_0 = arith.constant 0 : i32
    %c0_i32_1 = arith.constant 0 : i32
    return %c0_i32, %c0_i32_0 : i32, i32
  }
  func.func @transform_3(%arg0: i32) -> (i32, i32) {
    %c0_i32 = arith.constant 0 : i32
    %c0_i32_0 = arith.constant 0 : i32
    %c0_i32_1 = arith.constant 0 : i32
    return %c0_i32, %c0_i32_0 : i32, i32
  }
  func.func @transform_4(%arg0: i32) -> (i32, i32) {
    %c0_i32 = arith.constant 0 : i32
    %c0_i32_0 = arith.constant 0 : i32
    %c0_i32_1 = arith.constant 0 : i32
    return %c0_i32, %c0_i32_0 : i32, i32
  }
  func.func @transform_5(%arg0: i32) -> (i32, i32) {
    %c0_i32 = arith.constant 0 : i32
    %c0_i32_0 = arith.constant 0 : i32
    return %arg0, %c0_i32 : i32, i32
  }
  func.func @transform_6(%arg0: i32) -> (i32, i32) {
    %c0_i32 = arith.constant 0 : i32
    %c0_i32_0 = arith.constant 0 : i32
    return %arg0, %c0_i32 : i32, i32
  }
}

</mosaic_0001>

<llo_original>
// kernel: tpu_custom_call.1
$region0: #{tpu_custom_call.1}
  #allocation0 [shape = 'u32[]', space=smem, size = 0x4, offset = 0x4, fixed_abs, tag = 'smem constant byte address 0x4 - core index']
  #allocation1 [shape = 'u32[144,128]{1,0:T(1,128)}', space=vmem, size = 0x12000, scoped, tag = 'internal scratch']
  %s0 = inlined_call_operand.vmem [shape: f32[8,16], index: 0, kind: input, shape index: {}]
  %s1 = inlined_call_operand.vmem [shape: f32[16,64], index: 1, kind: input, shape index: {}]
  %s2 = inlined_call_operand.vmem [shape: f32[1,64], index: 2, kind: input, shape index: {}]
  %s3 = inlined_call_operand.vmem [shape: f32[64,5], index: 3, kind: input, shape index: {}]
  %s4 = inlined_call_operand.vmem [shape: f32[1,5], index: 4, kind: input, shape index: {}]
  %s5 = inlined_call_operand.vmem [shape: f32[8,4], index: 5, kind: output, shape index: {0}]
  %s6 = inlined_call_operand.vmem [shape: f32[8,1], index: 6, kind: output, shape index: {1}]
  %7 = xla_tuple %s5, %s6
  %s8 = sld [smem:[#allocation0]]
  $region38: #{tpu_custom_call.1} parent=0
    _
  %s10 = ssub.s32 1, %s8
  %s11 = scalar_select 0, %s10, %s8
  // Predicated region
  $region2: #{tpu_custom_call.1} parent=0 // pred_check
    _
  $region3: #{tpu_custom_call.1} parent=0 // pred_check_branch
    %13 = sbr.rel (0) target = $region5
  $region4: #{tpu_custom_call.1} parent=0 // pred_region
    _
  $region5: #{tpu_custom_call.1} parent=0 // pred_fallthru
    _
  // Predicated region
  $region6: #{tpu_custom_call.1} parent=0 // pred_check
    _
  $region7: #{tpu_custom_call.1} parent=0 // pred_check_branch
    %15 = sbr.rel (0) target = $region9
  $region8: #{tpu_custom_call.1} parent=0 // pred_region
    _
  $region9: #{tpu_custom_call.1} parent=0 // pred_fallthru
    _
  // Predicated region
  $region10: #{tpu_custom_call.1} parent=0 // pred_check
    _
  $region11: #{tpu_custom_call.1} parent=0 // pred_check_branch
    %17 = sbr.rel (0) target = $region13
  $region12: #{tpu_custom_call.1} parent=0 // pred_region
    _
  $region13: #{tpu_custom_call.1} parent=0 // pred_fallthru
    _
  // Predicated region
  $region14: #{tpu_custom_call.1} parent=0 // pred_check
    _
  $region15: #{tpu_custom_call.1} parent=0 // pred_check_branch
    %19 = sbr.rel (0) target = $region17
  $region16: #{tpu_custom_call.1} parent=0 // pred_region
    _
  $region17: #{tpu_custom_call.1} parent=0 // pred_fallthru
    _
  // Predicated region
  $region18: #{tpu_custom_call.1} parent=0 // pred_check
    _
  $region19: #{tpu_custom_call.1} parent=0 // pred_check_branch
    %21 = sbr.rel (0) target = $region21
  $region20: #{tpu_custom_call.1} parent=0 // pred_region
    _
  $region21: #{tpu_custom_call.1} parent=0 // pred_fallthru
    _
  %v22 = vld [vmem:[%s0] sm:$0xff]
  %v23 = vld [vmem:[%s1] sm:$0xff]
  %v24 = vld [vmem:[%s1 + $0x8] sm:$0xff]
  %v25 = vld [vmem:[%s2] sm:$0x1]
  %v27 = vlaneseq
  %v28 = vshrl.u32 %v27, 7
  %v29 = vsub.s32 0, %v28
  %v30 = vrot.slane %v25, %v29
  %vm32 = vcmask 130048
  %v34 = vsel %vm32, %v22, 0
  %36 = vmatprep.subr.mxu0 0.0
  %37 = vmatpush1.msra.mxu0 %v23
  %38 = vmatprep.subr.mxu0 0.0
  %39 = vmatpush1.msra.mxu0 %v24
  %40 = vmatprep.subr.mxu0 0.0
  %41 = vmatpush1.msra.mxu0 0.0
  %42 = vmatprep.subr.mxu0 0.0
  %43 = vmatpush1.msra.mxu0 0.0
  %44 = vmatprep.subr.mxu0 0.0
  %45 = vmatpush1.msra.mxu0 0.0
  %46 = vmatprep.subr.mxu0 0.0
  %47 = vmatpush1.msra.mxu0 0.0
  %48 = vmatprep.subr.mxu0 0.0
  %49 = vmatpush1.msra.mxu0 0.0
  %50 = vmatprep.subr.mxu0 0.0
  %51 = vmatpush1.msra.mxu0 0.0
  %52 = vmatprep.subr.mxu0 0.0
  %53 = vmatpush1.msra.mxu0 0.0
  %54 = vmatprep.subr.mxu0 0.0
  %55 = vmatpush1.msra.mxu0 0.0
  %56 = vmatprep.subr.mxu0 0.0
  %57 = vmatpush1.msra.mxu0 0.0
  %58 = vmatprep.subr.mxu0 0.0
  %59 = vmatpush1.msra.mxu0 0.0
  %60 = vmatprep.subr.mxu0 0.0
  %61 = vmatpush1.msra.mxu0 0.0
  %62 = vmatprep.subr.mxu0 0.0
  %63 = vmatpush1.msra.mxu0 0.0
  %64 = vmatprep.subr.mxu0 0.0
  %65 = vmatpush1.msra.mxu0 0.0
  %66 = vmatprep.subr.mxu0 0.0
  %67 = vmatpush1.msra.mxu0 0.0
  %68 = vmatprep.subr.mxu0 0.0
  %69 = vmatpush1.msra.mxu0 0.0
  %70 = vmatprep.subr.mxu0 0.0
  %71 = vmatpush1.msra.mxu0 0.0
  %72 = vmatprep.subr.mxu0 0.0
  %73 = vmatpush1.msra.mxu0 0.0
  %74 = vmatprep.subr.mxu0 0.0
  %75 = vmatpush1.msra.mxu0 0.0
  %76 = vmatprep.subr.mxu0 0.0
  %77 = vmatpush1.msra.mxu0 0.0
  %78 = vmatprep.subr.mxu0 0.0
  %79 = vmatpush1.msra.mxu0 0.0
  %80 = vmatprep.subr.mxu0 0.0
  %81 = vmatpush1.msra.mxu0 0.0
  %82 = vmatprep.subr.mxu0 0.0
  %83 = vmatpush1.msra.mxu0 0.0
  %84 = vmatprep.subr.mxu0 0.0
  %85 = vmatpush1.msra.mxu0 0.0
  %86 = vmatprep.subr.mxu0 0.0
  %87 = vmatpush1.msra.mxu0 0.0
  %88 = vmatprep.subr.mxu0 0.0
  %89 = vmatpush1.msra.mxu0 0.0
  %90 = vmatprep.subr.mxu0 0.0
  %91 = vmatpush1.msra.mxu0 0.0
  %92 = vmatprep.subr.mxu0 0.0
  %93 = vmatpush1.msra.mxu0 0.0
  %94 = vmatprep.subr.mxu0 0.0
  %95 = vmatpush1.msra.mxu0 0.0
  %96 = vmatprep.subr.mxu0 0.0
  %97 = vmatpush1.msra.mxu0 0.0
  %98 = vmatprep.subr.mxu0 0.0
  %99 = vmatpush1.msra.mxu0 0.0
  %100 = vmatprep.mubr.f32.mxu0 0.0
  %101 = vmatmul.mubr.f32.gmra.mrb[0].mxu0 %v34
  %v102 = vpop.f32.mrb[0].mxu0
  %v103 = vadd.f32 %v30, %v102
  %v104 = vpop.f32.mrb[0].mxu0
  %105 = vdwg.mxu0
  %v106 = vmax.f32 %v103, 0.0
  %v107 = vld [vmem:[%s3] sm:$0xff]
  %v108 = vld [vmem:[%s3 + $0x8] sm:$0xff]
  %v109 = vld [vmem:[%s3 + $0x10] sm:$0xff]
  %v110 = vld [vmem:[%s3 + $0x18] sm:$0xff]
  %v111 = vld [vmem:[%s3 + $0x20] sm:$0xff]
  %v112 = vld [vmem:[%s3 + $0x28] sm:$0xff]
  %v113 = vld [vmem:[%s3 + $0x30] sm:$0xff]
  %v114 = vld [vmem:[%s3 + $0x38] sm:$0xff]
  %v115 = vld [vmem:[%s4] sm:$0x1]
  %v117 = vlaneseq
  %v118 = vshrl.u32 %v117, 7
  %v119 = vsub.s32 0, %v118
  %v120 = vrot.slane %v115, %v119
  %vm122 = vcmask 523264
  %v124 = vsel %vm122, %v106, 0
  %126 = vmatprep.subr.mxu0 0.0
  %127 = vmatpush1.msra.mxu0 %v107
  %128 = vmatprep.subr.mxu0 0.0
  %129 = vmatpush1.msra.mxu0 %v108
  %130 = vmatprep.subr.mxu0 0.0
  %131 = vmatpush1.msra.mxu0 %v109
  %132 = vmatprep.subr.mxu0 0.0
  %133 = vmatpush1.msra.mxu0 %v110
  %134 = vmatprep.subr.mxu0 0.0
  %135 = vmatpush1.msra.mxu0 %v111
  %136 = vmatprep.subr.mxu0 0.0
  %137 = vmatpush1.msra.mxu0 %v112
  %138 = vmatprep.subr.mxu0 0.0
  %139 = vmatpush1.msra.mxu0 %v113
  %140 = vmatprep.subr.mxu0 0.0
  %141 = vmatpush1.msra.mxu0 %v114
  %142 = vmatprep.subr.mxu0 0.0
  %143 = vmatpush1.msra.mxu0 0.0
  %144 = vmatprep.subr.mxu0 0.0
  %145 = vmatpush1.msra.mxu0 0.0
  %146 = vmatprep.subr.mxu0 0.0
  %147 = vmatpush1.msra.mxu0 0.0
  %148 = vmatprep.subr.mxu0 0.0
  %149 = vmatpush1.msra.mxu0 0.0
  %150 = vmatprep.subr.mxu0 0.0
  %151 = vmatpush1.msra.mxu0 0.0
  %152 = vmatprep.subr.mxu0 0.0
  %153 = vmatpush1.msra.mxu0 0.0
  %154 = vmatprep.subr.mxu0 0.0
  %155 = vmatpush1.msra.mxu0 0.0
  %156 = vmatprep.subr.mxu0 0.0
  %157 = vmatpush1.msra.mxu0 0.0
  %158 = vmatprep.subr.mxu0 0.0
  %159 = vmatpush1.msra.mxu0 0.0
  %160 = vmatprep.subr.mxu0 0.0
  %161 = vmatpush1.msra.mxu0 0.0
  %162 = vmatprep.subr.mxu0 0.0
  %163 = vmatpush1.msra.mxu0 0.0
  %164 = vmatprep.subr.mxu0 0.0
  %165 = vmatpush1.msra.mxu0 0.0
  %166 = vmatprep.subr.mxu0 0.0
  %167 = vmatpush1.msra.mxu0 0.0
  %168 = vmatprep.subr.mxu0 0.0
  %169 = vmatpush1.msra.mxu0 0.0
  %170 = vmatprep.subr.mxu0 0.0
  %171 = vmatpush1.msra.mxu0 0.0
  %172 = vmatprep.subr.mxu0 0.0
  %173 = vmatpush1.msra.mxu0 0.0
  %174 = vmatprep.subr.mxu0 0.0
  %175 = vmatpush1.msra.mxu0 0.0
  %176 = vmatprep.subr.mxu0 0.0
  %177 = vmatpush1.msra.mxu0 0.0
  %178 = vmatprep.subr.mxu0 0.0
  %179 = vmatpush1.msra.mxu0 0.0
  %180 = vmatprep.subr.mxu0 0.0
  %181 = vmatpush1.msra.mxu0 0.0
  %182 = vmatprep.subr.mxu0 0.0
  %183 = vmatpush1.msra.mxu0 0.0
  %184 = vmatprep.subr.mxu0 0.0
  %185 = vmatpush1.msra.mxu0 0.0
  %186 = vmatprep.subr.mxu0 0.0
  %187 = vmatpush1.msra.mxu0 0.0
  %188 = vmatprep.subr.mxu0 0.0
  %189 = vmatpush1.msra.mxu0 0.0
  %190 = vmatprep.mubr.f32.mxu0 0.0
  %191 = vmatmul.mubr.f32.gmra.mrb[0].mxu0 %v124
  %v192 = vpop.f32.mrb[0].mxu0
  %v193 = vadd.f32 %v120, %v192
  %v194 = vpop.f32.mrb[0].mxu0
  %195 = vdwg.mxu0
  %v196 = vtanh.pop %v193
  %vm197 = vcmask 31744
  %198 = vst.msk [vmem:[%s5] sm:$0xff] %vm197, %v196
  %200 = vrot.lane.b32.xlu0 %v193, 124
  %v201 = vpop.permute.xlu0 %200
  %vm203 = vcmask 7168
  %204 = vst.msk [vmem:[%s6] sm:$0xff] %vm203, %v201
  // Predicated region
  $region22: #{tpu_custom_call.1} parent=0 // pred_check
    _
  $region23: #{tpu_custom_call.1} parent=0 // pred_check_branch
    %206 = sbr.rel (0) target = $region25
  $region24: #{tpu_custom_call.1} parent=0 // pred_region
    _
  $region25: #{tpu_custom_call.1} parent=0 // pred_fallthru
    _
  // Predicated region
  $region26: #{tpu_custom_call.1} parent=0 // pred_check
    _
  $region27: #{tpu_custom_call.1} parent=0 // pred_check_branch
    %208 = sbr.rel (0) target = $region29
  $region28: #{tpu_custom_call.1} parent=0 // pred_region
    _
  $region29: #{tpu_custom_call.1} parent=0 // pred_fallthru
    _
  // Predicated region
  $region30: #{tpu_custom_call.1} parent=0 // pred_check
    _
  $region31: #{tpu_custom_call.1} parent=0 // pred_check_branch
    %210 = sbr.rel (0) target = $region33
  $region32: #{tpu_custom_call.1} parent=0 // pred_region
    _
  $region33: #{tpu_custom_call.1} parent=0 // pred_fallthru
    _
  // Predicated region
  $region34: #{tpu_custom_call.1} parent=0 // pred_check
    _
  $region35: #{tpu_custom_call.1} parent=0 // pred_check_branch
    %212 = sbr.rel (0) target = $region37
  $region36: #{tpu_custom_call.1} parent=0 // pred_region
    _
  $region37: #{tpu_custom_call.1} parent=0 // pred_fallthru
    _

</llo_original>
